<compile_context>
chip_gen: v7x
topology: tpu7x:2x2x1
jax: 0.10.0
libtpu: 0.0.40
codegen_flags: <defaults>
</compile_context>

<pallas_src>
import functools

import jax
import jax.numpy as jnp
from jax.experimental import pallas as pl
from jax.experimental.pallas import tpu as pltpu

_SUBLANE = 8   # vreg sublane count (batch-tile alignment)


def _round_up(n, m):
    return ((n + m - 1) // m) * m


def _tpu_caps(default_vmem_bytes=64 << 20):
    """Generation-aware VMEM capacity and TensorCore count (conservative defaults)."""
    vmem = default_vmem_bytes
    cores = 1
    try:
        info = pltpu.get_tpu_info()
        vmem = int(getattr(info, "vmem_capacity_bytes", vmem))
        cores = int(getattr(info, "num_cores",
                            getattr(info, "tensorcores_per_chip", 1)) or 1)
    except Exception:
        pass
    return vmem, max(1, cores)


def _vmem_estimate(tile, dims, x_itemsize, weight_buffers):
    """Rough resident-VMEM bytes for one grid step."""
    w = weight_buffers * sum(dims[i] * dims[i + 1] * 2 for i in range(len(dims) - 1))  # bf16
    xin = 2 * tile * dims[0] * x_itemsize        # double-buffered input tile
    out = 2 * tile * dims[-1] * 4                # double-buffered f32 output tile
    inter = 2 * tile * max(dims) * (4 + 2)       # f32 acc + bf16 activation, 2x slack
    return w + xin + out + inter


def _mlp_kernel(n_layers, nonlinearity, x_ref, *refs):
    """Fused MLP forward for one batch tile: all matmuls + nonlinearities in one grid step."""
    w_refs = refs[:n_layers]
    o_ref = refs[n_layers]

    h = x_ref[...].astype(jnp.bfloat16)                   # cast to bf16 in-kernel (no wrapper pass)
    for i in range(n_layers):
        acc = jnp.dot(h, w_refs[i][...],                  # bf16 x bf16 -> f32 accumulation
                      preferred_element_type=jnp.float32)
        if i < n_layers - 1:
            h = nonlinearity(acc).astype(jnp.bfloat16)    # nonlinearity in f32, back to bf16
        else:
            o_ref[...] = acc.astype(o_ref.dtype)          # last layer: no nonlinearity


def mlp_forward(x, weights, *, nonlinearity=None, batch_tile=None, max_batch_tile=1024):
    """
    Args:
      x: array of any leading shape; flattened to (-1, dims[0]) like the PyTorch view.
      weights: list of (in_dim, out_dim) arrays (transposed PyTorch Linear weights).
      nonlinearity: elementwise jnp callable applied between layers (default: ReLU).
      batch_tile: rows per grid step; None -> auto (grow toward max_batch_tile within VMEM).
    Returns:
      (batch, dims[-1]) float32 predictions.
    """
    if nonlinearity is None:
        nonlinearity = lambda v: jnp.maximum(v, 0.0)

    n_layers = len(weights)
    dims = [weights[0].shape[0]] + [w.shape[1] for w in weights]

    vmem_cap, n_cores = _tpu_caps()
    budget = max(32 << 20, int(vmem_cap * 0.8))           # leave headroom for internal scratch

    # Weights cast to bf16 once, wrapper-side; read once per call (grid-invariant blocks).
    w_bf16 = [w.astype(jnp.bfloat16) for w in weights]

    x2 = x.reshape((-1, dims[0]))
    batch = x2.shape[0]
    x_itemsize = x2.dtype.itemsize

    # --- batch-tile selection: grow toward max_batch_tile, shrink only if VMEM demands it ---
    if batch_tile is None:
        tile = _round_up(min(batch, max_batch_tile), _SUBLANE)
    else:
        tile = min(_round_up(batch_tile, _SUBLANE), _round_up(batch, _SUBLANE))
    tile = max(tile, _SUBLANE)
    while tile > _SUBLANE and _vmem_estimate(tile, dims, x_itemsize, 1) > (3 * budget) // 4:
        tile = max(_SUBLANE, _round_up(tile // 2, _SUBLANE))

    n_tiles = -(-batch // tile)
    # Even out the grid only on multi-TensorCore chips (v7x megacore balance).
    if n_cores > 1 and n_tiles > 1 and n_tiles % n_cores:
        n_tiles = _round_up(n_tiles, n_cores)
    padded_batch = n_tiles * tile
    if padded_batch != batch:
        x2 = jnp.pad(x2, ((0, padded_batch - batch), (0, 0)))   # batch rows only, no dtype change

    kernel = functools.partial(_mlp_kernel, n_layers, nonlinearity)

    def _specs(single_buffer_w):
        in_specs = [pl.BlockSpec((tile, dims[0]), lambda i: (i, 0))]
        for w in w_bf16:
            if single_buffer_w:
                # Grid-invariant weights: single-buffer to halve their VMEM footprint.
                in_specs.append(pl.BlockSpec(w.shape, lambda i: (0, 0),
                                             pipeline_mode=pl.Buffered(1)))
            else:
                in_specs.append(pl.BlockSpec(w.shape, lambda i: (0, 0)))
        out_spec = pl.BlockSpec((tile, dims[-1]), lambda i: (i, 0))   # true-width output block
        return in_specs, out_spec

    # Cost estimate with TRUE dims / true batch (no padding inflation).
    flops = 2 * batch * sum(dims[i] * dims[i + 1] for i in range(n_layers))
    bytes_accessed = (batch * dims[0] * x_itemsize
                      + sum(int(w.size) * 2 for w in w_bf16)
                      + batch * dims[-1] * 4)

    def _call(single_buffer_w):
        in_specs, out_spec = _specs(single_buffer_w)
        return pl.pallas_call(
            kernel,
            out_shape=jax.ShapeDtypeStruct((padded_batch, dims[-1]), jnp.float32),
            grid_spec=pltpu.PrefetchScalarGridSpec(
                num_scalar_prefetch=0,
                grid=(n_tiles,),
                in_specs=in_specs,
                out_specs=out_spec,
            ),
            compiler_params=pltpu.CompilerParams(
                dimension_semantics=("parallel",),
                vmem_limit_bytes=int(budget),
            ),
            cost_estimate=pl.CostEstimate(
                flops=int(flops), transcendentals=0, bytes_accessed=int(bytes_accessed)),
        )(x2, *w_bf16)

    try:
        out = _call(single_buffer_w=True)
    except Exception:
        # Fallback if single-buffered pipeline mode is unsupported on this jax/Mosaic version.
        out = _call(single_buffer_w=False)

    return out[:batch, :]


def init_weights(dimensions, key):
    """Deterministic init mimicking torch.nn.Linear (uniform +-1/sqrt(fan_in)), stored as (in, out)."""
    weights = []
    for d_in, d_out in zip(dimensions[:-1], dimensions[1:]):
        key, sub = jax.random.split(key)
        bound = 1.0 / (d_in ** 0.5)
        w = jax.random.uniform(sub, (d_in, d_out), jnp.float32, -bound, bound)
        weights.append(w)
    return weights


def mlp_reference(x, weights):
    """Pure-JAX f32 reference for correctness check."""
    h = x.reshape((-1, weights[0].shape[0])).astype(jnp.float32)
    for i, w in enumerate(weights):
        h = h @ w
        if i < len(weights) - 1:
            h = jnp.maximum(h, 0.0)
    return h


if __name__ == "__main__":
    # dimensions = [32, 64, 64, 16]  (2 hidden layers + output layer), ReLU nonlinearity.
    dimensions = [32, 64, 64, 16]
    key = jax.random.PRNGKey(0)
    k_x, k_w = jax.random.split(key)

    # Input with extra leading dims; forward() flattens it to (-1, dimensions[0]).
    x = jax.random.normal(k_x, (2, 8, 32), jnp.float32)   # -> flattened to (16, 32)
    weights = init_weights(dimensions, k_w)

    y = mlp_forward(x, weights)
    y = jax.block_until_ready(y)
    y_ref = mlp_reference(x, weights)

    assert y.shape == (16, dimensions[-1])
    # bf16 MXU inputs with f32 accumulation -> compare against the f32 reference with relaxed tol.
    assert jnp.allclose(y, y_ref, atol=5e-2, rtol=5e-2), "mismatch vs reference"

    print("KERNEL_OK")
</pallas_src>

<mosaic_0001>
module attributes {stable_mosaic.version = 11 : i64} {
  func.func @_mlp_kernel(%arg0: i32, %arg1: memref<16x32xf32, #tpu.memory_space<vmem>>, %arg2: memref<32x64xbf16, #tpu.memory_space<vmem>>, %arg3: memref<64x64xbf16, #tpu.memory_space<vmem>>, %arg4: memref<64x16xbf16, #tpu.memory_space<vmem>>, %arg5: memref<16x16xf32, #tpu.memory_space<vmem>>) attributes {dimension_semantics = [#tpu.dimension_semantics<parallel>], iteration_bounds = array<i64: 1>, scalar_prefetch = 0 : i64, scratch_operands = 0 : i64, tpu.core_type = #tpu.core_type<tc>, window_params = [{transform_indices = @transform_0, window_bounds = array<i64: 16, 32>}, {pipeline_mode = #tpu.pipeline_mode<synchronous>, transform_indices = @transform_1, window_bounds = array<i64: 32, 64>}, {pipeline_mode = #tpu.pipeline_mode<synchronous>, transform_indices = @transform_2, window_bounds = array<i64: 64, 64>}, {pipeline_mode = #tpu.pipeline_mode<synchronous>, transform_indices = @transform_3, window_bounds = array<i64: 64, 16>}, {transform_indices = @transform_4, window_bounds = array<i64: 16, 16>}]} {
    %c0 = arith.constant 0 : index
    %c0_0 = arith.constant 0 : index
    %0 = vector.load %arg1[%c0, %c0_0] : memref<16x32xf32, #tpu.memory_space<vmem>>, vector<16x32xf32>
    %1 = arith.truncf %0 : vector<16x32xf32> to vector<16x32xbf16>
    %c0_1 = arith.constant 0 : index
    %c0_2 = arith.constant 0 : index
    %2 = vector.load %arg2[%c0_1, %c0_2] : memref<32x64xbf16, #tpu.memory_space<vmem>>, vector<32x64xbf16>
    %cst = arith.constant dense<0.000000e+00> : vector<16x64xf32>
    %3 = tpu.matmul %1, %2, %cst {dimension_numbers = #tpu.dot_dimension_numbers<[1], [0], [0], [1], [0, 0, 1, 1], [], []>} : vector<16x32xbf16>, vector<32x64xbf16>, vector<16x64xf32> -> vector<16x64xf32>
    %cst_3 = arith.constant 0.000000e+00 : f32
    %4 = vector.broadcast %cst_3 : f32 to vector<16x64xf32>
    %5 = arith.maximumf %3, %4 : vector<16x64xf32>
    %6 = arith.truncf %5 : vector<16x64xf32> to vector<16x64xbf16>
    %c0_4 = arith.constant 0 : index
    %c0_5 = arith.constant 0 : index
    %7 = vector.load %arg3[%c0_4, %c0_5] : memref<64x64xbf16, #tpu.memory_space<vmem>>, vector<64x64xbf16>
    %cst_6 = arith.constant dense<0.000000e+00> : vector<16x64xf32>
    %8 = tpu.matmul %6, %7, %cst_6 {dimension_numbers = #tpu.dot_dimension_numbers<[1], [0], [0], [1], [0, 0, 1, 1], [], []>} : vector<16x64xbf16>, vector<64x64xbf16>, vector<16x64xf32> -> vector<16x64xf32>
    %cst_7 = arith.constant 0.000000e+00 : f32
    %9 = vector.broadcast %cst_7 : f32 to vector<16x64xf32>
    %10 = arith.maximumf %8, %9 : vector<16x64xf32>
    %11 = arith.truncf %10 : vector<16x64xf32> to vector<16x64xbf16>
    %c0_8 = arith.constant 0 : index
    %c0_9 = arith.constant 0 : index
    %12 = vector.load %arg4[%c0_8, %c0_9] : memref<64x16xbf16, #tpu.memory_space<vmem>>, vector<64x16xbf16>
    %cst_10 = arith.constant dense<0.000000e+00> : vector<16x16xf32>
    %13 = tpu.matmul %11, %12, %cst_10 {dimension_numbers = #tpu.dot_dimension_numbers<[1], [0], [0], [1], [0, 0, 1, 1], [], []>} : vector<16x64xbf16>, vector<64x16xbf16>, vector<16x16xf32> -> vector<16x16xf32>
    %c0_11 = arith.constant 0 : index
    %c0_12 = arith.constant 0 : index
    %14 = vector.load %arg5[%c0_11, %c0_12] : memref<16x16xf32, #tpu.memory_space<vmem>>, vector<16x16xf32>
    tpu.vector_store %arg5[%c0_11, %c0_12], %13 {strides = array<i32>} : memref<16x16xf32, #tpu.memory_space<vmem>>, vector<16x16xf32>,
    return
  }
  func.func @transform_0(%arg0: i32) -> (i32, i32) {
    %c0_i32 = arith.constant 0 : i32
    %c0_i32_0 = arith.constant 0 : i32
    return %arg0, %c0_i32 : i32, i32
  }
  func.func @transform_1(%arg0: i32) -> (i32, i32) {
    %c0_i32 = arith.constant 0 : i32
    %c0_i32_0 = arith.constant 0 : i32
    %c0_i32_1 = arith.constant 0 : i32
    return %c0_i32, %c0_i32_0 : i32, i32
  }
  func.func @transform_2(%arg0: i32) -> (i32, i32) {
    %c0_i32 = arith.constant 0 : i32
    %c0_i32_0 = arith.constant 0 : i32
    %c0_i32_1 = arith.constant 0 : i32
    return %c0_i32, %c0_i32_0 : i32, i32
  }
  func.func @transform_3(%arg0: i32) -> (i32, i32) {
    %c0_i32 = arith.constant 0 : i32
    %c0_i32_0 = arith.constant 0 : i32
    %c0_i32_1 = arith.constant 0 : i32
    return %c0_i32, %c0_i32_0 : i32, i32
  }
  func.func @transform_4(%arg0: i32) -> (i32, i32) {
    %c0_i32 = arith.constant 0 : i32
    %c0_i32_0 = arith.constant 0 : i32
    return %arg0, %c0_i32 : i32, i32
  }
}

module attributes {stable_mosaic.version = 11 : i64} {
  func.func @_mlp_kernel(%arg0: i32, %arg1: memref<16x32xf32, #tpu.memory_space<vmem>>, %arg2: memref<32x64xbf16, #tpu.memory_space<vmem>>, %arg3: memref<64x64xbf16, #tpu.memory_space<vmem>>, %arg4: memref<64x16xbf16, #tpu.memory_space<vmem>>, %arg5: memref<16x16xf32, #tpu.memory_space<vmem>>) attributes {dimension_semantics = [#tpu.dimension_semantics<parallel>], iteration_bounds = array<i64: 1>, scalar_prefetch = 0 : i64, scratch_operands = 0 : i64, tpu.core_type = #tpu.core_type<tc>, window_params = [{transform_indices = @transform_0, window_bounds = array<i64: 16, 32>}, {pipeline_mode = #tpu.pipeline_mode<synchronous>, transform_indices = @transform_1, window_bounds = array<i64: 32, 64>}, {pipeline_mode = #tpu.pipeline_mode<synchronous>, transform_indices = @transform_2, window_bounds = array<i64: 64, 64>}, {pipeline_mode = #tpu.pipeline_mode<synchronous>, transform_indices = @transform_3, window_bounds = array<i64: 64, 16>}, {transform_indices = @transform_4, window_bounds = array<i64: 16, 16>}]} {
    %c0 = arith.constant 0 : index
    %c0_0 = arith.constant 0 : index
    %0 = vector.load %arg1[%c0, %c0_0] : memref<16x32xf32, #tpu.memory_space<vmem>>, vector<16x32xf32>
    %1 = arith.truncf %0 : vector<16x32xf32> to vector<16x32xbf16>
    %c0_1 = arith.constant 0 : index
    %c0_2 = arith.constant 0 : index
    %2 = vector.load %arg2[%c0_1, %c0_2] : memref<32x64xbf16, #tpu.memory_space<vmem>>, vector<32x64xbf16>
    %cst = arith.constant dense<0.000000e+00> : vector<16x64xf32>
    %3 = tpu.matmul %1, %2, %cst {dimension_numbers = #tpu.dot_dimension_numbers<[1], [0], [0], [1], [0, 0, 1, 1], [], []>} : vector<16x32xbf16>, vector<32x64xbf16>, vector<16x64xf32> -> vector<16x64xf32>
    %cst_3 = arith.constant 0.000000e+00 : f32
    %4 = vector.broadcast %cst_3 : f32 to vector<16x64xf32>
    %5 = arith.maximumf %3, %4 : vector<16x64xf32>
    %6 = arith.truncf %5 : vector<16x64xf32> to vector<16x64xbf16>
    %c0_4 = arith.constant 0 : index
    %c0_5 = arith.constant 0 : index
    %7 = vector.load %arg3[%c0_4, %c0_5] : memref<64x64xbf16, #tpu.memory_space<vmem>>, vector<64x64xbf16>
    %cst_6 = arith.constant dense<0.000000e+00> : vector<16x64xf32>
    %8 = tpu.matmul %6, %7, %cst_6 {dimension_numbers = #tpu.dot_dimension_numbers<[1], [0], [0], [1], [0, 0, 1, 1], [], []>} : vector<16x64xbf16>, vector<64x64xbf16>, vector<16x64xf32> -> vector<16x64xf32>
    %cst_7 = arith.constant 0.000000e+00 : f32
    %9 = vector.broadcast %cst_7 : f32 to vector<16x64xf32>
    %10 = arith.maximumf %8, %9 : vector<16x64xf32>
    %11 = arith.truncf %10 : vector<16x64xf32> to vector<16x64xbf16>
    %c0_8 = arith.constant 0 : index
    %c0_9 = arith.constant 0 : index
    %12 = vector.load %arg4[%c0_8, %c0_9] : memref<64x16xbf16, #tpu.memory_space<vmem>>, vector<64x16xbf16>
    %cst_10 = arith.constant dense<0.000000e+00> : vector<16x16xf32>
    %13 = tpu.matmul %11, %12, %cst_10 {dimension_numbers = #tpu.dot_dimension_numbers<[1], [0], [0], [1], [0, 0, 1, 1], [], []>} : vector<16x64xbf16>, vector<64x16xbf16>, vector<16x16xf32> -> vector<16x16xf32>
    %c0_11 = arith.constant 0 : index
    %c0_12 = arith.constant 0 : index
    %14 = vector.load %arg5[%c0_11, %c0_12] : memref<16x16xf32, #tpu.memory_space<vmem>>, vector<16x16xf32>
    tpu.vector_store %arg5[%c0_11, %c0_12], %13 {strides = array<i32>} : memref<16x16xf32, #tpu.memory_space<vmem>>, vector<16x16xf32>,
    return
  }
  func.func @transform_0(%arg0: i32) -> (i32, i32) {
    %c0_i32 = arith.constant 0 : i32
    %c0_i32_0 = arith.constant 0 : i32
    return %arg0, %c0_i32 : i32, i32
  }
  func.func @transform_1(%arg0: i32) -> (i32, i32) {
    %c0_i32 = arith.constant 0 : i32
    %c0_i32_0 = arith.constant 0 : i32
    %c0_i32_1 = arith.constant 0 : i32
    return %c0_i32, %c0_i32_0 : i32, i32
  }
  func.func @transform_2(%arg0: i32) -> (i32, i32) {
    %c0_i32 = arith.constant 0 : i32
    %c0_i32_0 = arith.constant 0 : i32
    %c0_i32_1 = arith.constant 0 : i32
    return %c0_i32, %c0_i32_0 : i32, i32
  }
  func.func @transform_3(%arg0: i32) -> (i32, i32) {
    %c0_i32 = arith.constant 0 : i32
    %c0_i32_0 = arith.constant 0 : i32
    %c0_i32_1 = arith.constant 0 : i32
    return %c0_i32, %c0_i32_0 : i32, i32
  }
  func.func @transform_4(%arg0: i32) -> (i32, i32) {
    %c0_i32 = arith.constant 0 : i32
    %c0_i32_0 = arith.constant 0 : i32
    return %arg0, %c0_i32 : i32, i32
  }
}

</mosaic_0001>

<llo_original>
// kernel: tpu_custom_call.1
$region0: #{tpu_custom_call.1}
  #allocation0 [shape = 'u32[]', space=smem, size = 0x4, offset = 0x4, fixed_abs, tag = 'smem constant byte address 0x4 - core index']
  #allocation1 [shape = 'u32[144,128]{1,0:T(1,128)}', space=vmem, size = 0x12000, scoped, tag = 'internal scratch']
  %s0 = inlined_call_operand.hbm [shape: f32[16,32], index: 0, kind: input, shape index: {}]
  %s1 = inlined_call_operand.hbm [shape: bf16[32,64], index: 1, kind: input, shape index: {}]
  %s2 = inlined_call_operand.vmem [shape: bf16[64,64], index: 2, kind: input, shape index: {}]
  %s3 = inlined_call_operand.vmem [shape: bf16[64,16], index: 3, kind: input, shape index: {}]
  %s4 = inlined_call_operand.hbm [shape: f32[16,16], index: 4, kind: output, shape index: {}]
  %s5 = sld [smem:[#allocation0]]
  $region34: #{tpu_custom_call.1} parent=0
    _
  %s7 = ssub.s32 1, %s5
  %s8 = scalar_select 0, %s7, %s5
  $region1: #{tpu_custom_call.1} parent=0
    #allocation2 [shape = 'u8[8192]{0}', space=vmem, size = 0x2000, scoped, tag = 'input window, operand 0, single buffered']
    #allocation3 [shape = 's32[1]{0}', space=sflag, size = 0x4, scoped, tag = 'scoped memory for tpu_custom_call.1']
    #allocation4 [shape = 's32[1]{0}', space=sflag, size = 0x4, scoped, tag = 'scoped memory for tpu_custom_call.1']
    #allocation5 [shape = 'u8[8192]{0}', space=vmem, size = 0x2000, scoped, tag = 'input window, operand 1, single buffered']
    #allocation6 [shape = 's32[1]{0}', space=sflag, size = 0x4, scoped, tag = 'scoped memory for tpu_custom_call.1']
    #allocation7 [shape = 'u8[8192]{0}', space=vmem, size = 0x2000, scoped, tag = 'output window, operand 0, single buffered']
    %9 = vsyncpa [#allocation3], 0
    %10 = vsyncpa [#allocation6], 0
    %11 = vsyncpa [#allocation4], 0
    // Predicated region
    $region2: #{tpu_custom_call.1} parent=1 // pred_check
      _
    $region3: #{tpu_custom_call.1} parent=1 // pred_check_branch
      %13 = sbr.rel (0) target = $region5
    $region4: #{tpu_custom_call.1} parent=1 // pred_region
      %s15 = ssub.s32 256, 256
      %16 = vsyncadd [#allocation3], %s15
      %s17 = sshll.u32 [#allocation2], 4
      %s18 = int_to_ptr.vmem [resolvable:$true] %s17
      %23 = dma.hbm_to_vmem [thread:$0]  %s0, 256, %s18, [#allocation3], 128, 128, 8
    $region5: #{tpu_custom_call.1} parent=1 // pred_fallthru
      _
    // Predicated region
    $region6: #{tpu_custom_call.1} parent=1 // pred_check
      _
    $region7: #{tpu_custom_call.1} parent=1 // pred_check_branch
      %25 = sbr.rel (0) target = $region9
    $region8: #{tpu_custom_call.1} parent=1 // pred_region
      %s27 = ssub.s32 256, 256
      %28 = vsyncadd [#allocation6], %s27
      %s29 = sshll.u32 [#allocation5], 4
      %s30 = int_to_ptr.vmem [resolvable:$true] %s29
      %35 = dma.hbm_to_vmem [thread:$0]  %s1, 256, %s30, [#allocation6], 64, 64, 4
    $region9: #{tpu_custom_call.1} parent=1 // pred_fallthru
      _
    // Predicated region
    $region10: #{tpu_custom_call.1} parent=1 // pred_check
      _
    $region11: #{tpu_custom_call.1} parent=1 // pred_check_branch
      %37 = sbr.rel (0) target = $region13
    $region12: #{tpu_custom_call.1} parent=1 // pred_region
      _
    $region13: #{tpu_custom_call.1} parent=1 // pred_fallthru
      _
    // Predicated region
    $region14: #{tpu_custom_call.1} parent=1 // pred_check
      _
    $region15: #{tpu_custom_call.1} parent=1 // pred_check_branch
      %39 = sbr.rel (0) target = $region17
    $region16: #{tpu_custom_call.1} parent=1 // pred_region
      _
    $region17: #{tpu_custom_call.1} parent=1 // pred_fallthru
      _
    // Predicated region
    $region18: #{tpu_custom_call.1} parent=1 // pred_check
      _
    $region19: #{tpu_custom_call.1} parent=1 // pred_check_branch
      %41 = sbr.rel (0) target = $region21
    $region20: #{tpu_custom_call.1} parent=1 // pred_region
      %42 = dma.done [#allocation3], 256
    $region21: #{tpu_custom_call.1} parent=1 // pred_fallthru
      _
    // Predicated region
    $region22: #{tpu_custom_call.1} parent=1 // pred_check
      _
    $region23: #{tpu_custom_call.1} parent=1 // pred_check_branch
      %44 = sbr.rel (0) target = $region25
    $region24: #{tpu_custom_call.1} parent=1 // pred_region
      %45 = dma.done [#allocation6], 256
    $region25: #{tpu_custom_call.1} parent=1 // pred_fallthru
      _
    %v47 = vld [vmem:[#allocation2] sm:$0xff]
    %v48 = vld [vmem:[#allocation2 + $0x8] sm:$0xff]
    %v49 = vpack.c.bf16 %v48, %v47
    %v50 = vld [vmem:[#allocation5] sm:$0xf]
    %v51 = vld [vmem:[#allocation5 + $0x4] sm:$0xf]
    %v52 = vld [vmem:[#allocation5 + $0x8] sm:$0xf]
    %v53 = vld [vmem:[#allocation5 + $0xc] sm:$0xf]
    %v58 = vunpack.c.l.b16 %v50
    %v59 = vunpack.c.l.b16 %v51
    %v60 = vunpack.c.l.b16 %v52
    %v61 = vunpack.c.l.b16 %v53
    %v62 = vpack.c.b16 %v59, %v58
    %v63 = vpack.c.b16 %v61, %v60
    %vm66 = vcmask 261120
    %v68 = vsel %vm66, %v49, 0
    %70 = vmatprep.subr.bf16.mxu0 0
    %71 = vmatpush1.bf16.msra.mxu0 %v62
    %72 = vmatprep.subr.bf16.mxu0 0
    %73 = vmatpush1.bf16.msra.mxu0 %v63
    %74 = vmatprep.subr.bf16.mxu0 0
    %75 = vmatpush1.bf16.msra.mxu0 0
    %76 = vmatprep.subr.bf16.mxu0 0
    %77 = vmatpush1.bf16.msra.mxu0 0
    %78 = vmatprep.subr.bf16.mxu0 0
    %79 = vmatpush1.bf16.msra.mxu0 0
    %80 = vmatprep.subr.bf16.mxu0 0
    %81 = vmatpush1.bf16.msra.mxu0 0
    %82 = vmatprep.subr.bf16.mxu0 0
    %83 = vmatpush1.bf16.msra.mxu0 0
    %84 = vmatprep.subr.bf16.mxu0 0
    %85 = vmatpush1.bf16.msra.mxu0 0
    %86 = vmatprep.subr.bf16.mxu0 0
    %87 = vmatpush1.bf16.msra.mxu0 0
    %88 = vmatprep.subr.bf16.mxu0 0
    %89 = vmatpush1.bf16.msra.mxu0 0
    %90 = vmatprep.subr.bf16.mxu0 0
    %91 = vmatpush1.bf16.msra.mxu0 0
    %92 = vmatprep.subr.bf16.mxu0 0
    %93 = vmatpush1.bf16.msra.mxu0 0
    %94 = vmatprep.subr.bf16.mxu0 0
    %95 = vmatpush1.bf16.msra.mxu0 0
    %96 = vmatprep.subr.bf16.mxu0 0
    %97 = vmatpush1.bf16.msra.mxu0 0
    %98 = vmatprep.subr.bf16.mxu0 0
    %99 = vmatpush1.bf16.msra.mxu0 0
    %100 = vmatprep.subr.bf16.mxu0 0
    %101 = vmatpush1.bf16.msra.mxu0 0
    %102 = vmatprep.mubr.bf16.mxu0 0
    %103 = vmatmul.mubr.bf16.gmra.mrb[0].mxu0 %v68
    %v104 = vpop.f32.mrb[0].mxu0
    %v105 = vadd.f32 0.0, %v104
    %v106 = vpop.f32.mrb[0].mxu0
    %v107 = vpop.f32.mrb[0].mxu0
    %v108 = vadd.f32 0.0, %v107
    %v109 = vpop.f32.mrb[0].mxu0
    %110 = vdwg.mxu0
    %v111 = vmax.f32 %v105, 0.0
    %v112 = vmax.f32 %v108, 0.0
    %v113 = vpack.c.bf16 %v112, %v111
    %v114 = vld [vmem:[%s2] sm:$0xf]
    %v115 = vld [vmem:[%s2 + $0x4] sm:$0xf]
    %v116 = vld [vmem:[%s2 + $0x8] sm:$0xf]
    %v117 = vld [vmem:[%s2 + $0xc] sm:$0xf]
    %v118 = vld [vmem:[%s2 + $0x10] sm:$0xf]
    %v119 = vld [vmem:[%s2 + $0x14] sm:$0xf]
    %v120 = vld [vmem:[%s2 + $0x18] sm:$0xf]
    %v121 = vld [vmem:[%s2 + $0x1c] sm:$0xf]
    %v130 = vunpack.c.l.b16 %v114
    %v131 = vunpack.c.l.b16 %v115
    %v132 = vunpack.c.l.b16 %v116
    %v133 = vunpack.c.l.b16 %v117
    %v134 = vunpack.c.l.b16 %v118
    %v135 = vunpack.c.l.b16 %v119
    %v136 = vunpack.c.l.b16 %v120
    %v137 = vunpack.c.l.b16 %v121
    %v138 = vpack.c.b16 %v131, %v130
    %v139 = vpack.c.b16 %v133, %v132
    %v140 = vpack.c.b16 %v135, %v134
    %v141 = vpack.c.b16 %v137, %v136
    %vm146 = vcmask 523264
    %v148 = vsel %vm146, %v113, 0
    %150 = vmatprep.subr.bf16.mxu0 0
    %151 = vmatpush1.bf16.msra.mxu0 %v138
    %152 = vmatprep.subr.bf16.mxu0 0
    %153 = vmatpush1.bf16.msra.mxu0 %v139
    %154 = vmatprep.subr.bf16.mxu0 0
    %155 = vmatpush1.bf16.msra.mxu0 %v140
    %156 = vmatprep.subr.bf16.mxu0 0
    %157 = vmatpush1.bf16.msra.mxu0 %v141
    %158 = vmatprep.subr.bf16.mxu0 0
    %159 = vmatpush1.bf16.msra.mxu0 0
    %160 = vmatprep.subr.bf16.mxu0 0
    %161 = vmatpush1.bf16.msra.mxu0 0
    %162 = vmatprep.subr.bf16.mxu0 0
    %163 = vmatpush1.bf16.msra.mxu0 0
    %164 = vmatprep.subr.bf16.mxu0 0
    %165 = vmatpush1.bf16.msra.mxu0 0
    %166 = vmatprep.subr.bf16.mxu0 0
    %167 = vmatpush1.bf16.msra.mxu0 0
    %168 = vmatprep.subr.bf16.mxu0 0
    %169 = vmatpush1.bf16.msra.mxu0 0
    %170 = vmatprep.subr.bf16.mxu0 0
    %171 = vmatpush1.bf16.msra.mxu0 0
    %172 = vmatprep.subr.bf16.mxu0 0
    %173 = vmatpush1.bf16.msra.mxu0 0
    %174 = vmatprep.subr.bf16.mxu0 0
    %175 = vmatpush1.bf16.msra.mxu0 0
    %176 = vmatprep.subr.bf16.mxu0 0
    %177 = vmatpush1.bf16.msra.mxu0 0
    %178 = vmatprep.subr.bf16.mxu0 0
    %179 = vmatpush1.bf16.msra.mxu0 0
    %180 = vmatprep.subr.bf16.mxu0 0
    %181 = vmatpush1.bf16.msra.mxu0 0
    %182 = vmatprep.mubr.bf16.mxu0 0
    %183 = vmatmul.mubr.bf16.gmra.mrb[0].mxu0 %v148
    %v184 = vpop.f32.mrb[0].mxu0
    %v185 = vadd.f32 0.0, %v184
    %v186 = vpop.f32.mrb[0].mxu0
    %v187 = vpop.f32.mrb[0].mxu0
    %v188 = vadd.f32 0.0, %v187
    %v189 = vpop.f32.mrb[0].mxu0
    %190 = vdwg.mxu0
    %v191 = vmax.f32 %v185, 0.0
    %v192 = vmax.f32 %v188, 0.0
    %v193 = vpack.c.bf16 %v192, %v191
    %v194 = vld [vmem:[%s3] sm:$0xf]
    %v195 = vld [vmem:[%s3 + $0x4] sm:$0xf]
    %v196 = vld [vmem:[%s3 + $0x8] sm:$0xf]
    %v197 = vld [vmem:[%s3 + $0xc] sm:$0xf]
    %v198 = vld [vmem:[%s3 + $0x10] sm:$0xf]
    %v199 = vld [vmem:[%s3 + $0x14] sm:$0xf]
    %v200 = vld [vmem:[%s3 + $0x18] sm:$0xf]
    %v201 = vld [vmem:[%s3 + $0x1c] sm:$0xf]
    %v210 = vunpack.c.l.b16 %v194
    %v211 = vunpack.c.l.b16 %v195
    %v212 = vunpack.c.l.b16 %v196
    %v213 = vunpack.c.l.b16 %v197
    %v214 = vunpack.c.l.b16 %v198
    %v215 = vunpack.c.l.b16 %v199
    %v216 = vunpack.c.l.b16 %v200
    %v217 = vunpack.c.l.b16 %v201
    %v218 = vpack.c.b16 %v211, %v210
    %v219 = vpack.c.b16 %v213, %v212
    %v220 = vpack.c.b16 %v215, %v214
    %v221 = vpack.c.b16 %v217, %v216
    %v227 = vsel %vm146, %v193, 0
    %229 = vmatprep.subr.bf16.mxu0 0
    %230 = vmatpush1.bf16.msra.mxu0 %v218
    %231 = vmatprep.subr.bf16.mxu0 0
    %232 = vmatpush1.bf16.msra.mxu0 %v219
    %233 = vmatprep.subr.bf16.mxu0 0
    %234 = vmatpush1.bf16.msra.mxu0 %v220
    %235 = vmatprep.subr.bf16.mxu0 0
    %236 = vmatpush1.bf16.msra.mxu0 %v221
    %237 = vmatprep.subr.bf16.mxu0 0
    %238 = vmatpush1.bf16.msra.mxu0 0
    %239 = vmatprep.subr.bf16.mxu0 0
    %240 = vmatpush1.bf16.msra.mxu0 0
    %241 = vmatprep.subr.bf16.mxu0 0
    %242 = vmatpush1.bf16.msra.mxu0 0
    %243 = vmatprep.subr.bf16.mxu0 0
    %244 = vmatpush1.bf16.msra.mxu0 0
    %245 = vmatprep.subr.bf16.mxu0 0
    %246 = vmatpush1.bf16.msra.mxu0 0
    %247 = vmatprep.subr.bf16.mxu0 0
    %248 = vmatpush1.bf16.msra.mxu0 0
    %249 = vmatprep.subr.bf16.mxu0 0
    %250 = vmatpush1.bf16.msra.mxu0 0
    %251 = vmatprep.subr.bf16.mxu0 0
    %252 = vmatpush1.bf16.msra.mxu0 0
    %253 = vmatprep.subr.bf16.mxu0 0
    %254 = vmatpush1.bf16.msra.mxu0 0
    %255 = vmatprep.subr.bf16.mxu0 0
    %256 = vmatpush1.bf16.msra.mxu0 0
    %257 = vmatprep.subr.bf16.mxu0 0
    %258 = vmatpush1.bf16.msra.mxu0 0
    %259 = vmatprep.subr.bf16.mxu0 0
    %260 = vmatpush1.bf16.msra.mxu0 0
    %261 = vmatprep.mubr.bf16.mxu0 0
    %262 = vmatmul.mubr.bf16.gmra.mrb[0].mxu0 %v227
    %v263 = vpop.f32.mrb[0].mxu0
    %v264 = vadd.f32 0.0, %v263
    %v265 = vpop.f32.mrb[0].mxu0
    %v266 = vpop.f32.mrb[0].mxu0
    %v267 = vadd.f32 0.0, %v266
    %v268 = vpop.f32.mrb[0].mxu0
    %269 = vdwg.mxu0
    %vm270 = vcmask 130048
    %271 = vst.msk [vmem:[#allocation7] sm:$0xff] %vm270, %v264
    %272 = vst.msk [vmem:[#allocation7 + $0x8] sm:$0xff] %vm270, %v267
    // Predicated region
    $region26: #{tpu_custom_call.1} parent=1 // pred_check
      _
    $region27: #{tpu_custom_call.1} parent=1 // pred_check_branch
      %274 = sbr.rel (0) target = $region29
    $region28: #{tpu_custom_call.1} parent=1 // pred_region
      %s276 = ssub.s32 256, 256
      %277 = vsyncadd [#allocation4], %s276
      %s278 = sshll.u32 [#allocation7], 4
      %s279 = int_to_ptr.vmem [resolvable:$true] %s278
      %284 = dma.vmem_to_hbm [thread:$0]  %s279, 256, %s4, [#allocation4], 128, 128, 8
    $region29: #{tpu_custom_call.1} parent=1 // pred_fallthru
      _
    // Predicated region
    $region30: #{tpu_custom_call.1} parent=1 // pred_check
      _
    $region31: #{tpu_custom_call.1} parent=1 // pred_check_branch
      %286 = sbr.rel (0) target = $region33
    $region32: #{tpu_custom_call.1} parent=1 // pred_region
      %287 = dma.done [#allocation4], 256
    $region33: #{tpu_custom_call.1} parent=1 // pred_fallthru
      _
    %288 = vsyncpa [#allocation3], 1
    %289 = vsyncpa [#allocation6], 1
    %290 = vsyncpa [#allocation4], 1

// kernel: tpu_custom_call.1
$region0: #{tpu_custom_call.1}
  #allocation0 [shape = 'u32[]', space=smem, size = 0x4, offset = 0x4, fixed_abs, tag = 'smem constant byte address 0x4 - core index']
  #allocation1 [shape = 'u32[144,128]{1,0:T(1,128)}', space=vmem, size = 0x12000, scoped, tag = 'internal scratch']
  %s0 = inlined_call_operand.hbm [shape: f32[16,32], index: 0, kind: input, shape index: {}]
  %s1 = inlined_call_operand.hbm [shape: bf16[32,64], index: 1, kind: input, shape index: {}]
  %s2 = inlined_call_operand.vmem [shape: bf16[64,64], index: 2, kind: input, shape index: {}]
  %s3 = inlined_call_operand.vmem [shape: bf16[64,16], index: 3, kind: input, shape index: {}]
  %s4 = inlined_call_operand.hbm [shape: f32[16,16], index: 4, kind: output, shape index: {}]
  %s5 = sld [smem:[#allocation0]]
  $region34: #{tpu_custom_call.1} parent=0
    _
  %s7 = ssub.s32 1, %s5
  %s8 = scalar_select 0, %s7, %s5
  $region1: #{tpu_custom_call.1} parent=0
    #allocation2 [shape = 'u8[8192]{0}', space=vmem, size = 0x2000, scoped, tag = 'input window, operand 0, single buffered']
    #allocation3 [shape = 's32[1]{0}', space=sflag, size = 0x4, scoped, tag = 'scoped memory for tpu_custom_call.1']
    #allocation4 [shape = 's32[1]{0}', space=sflag, size = 0x4, scoped, tag = 'scoped memory for tpu_custom_call.1']
    #allocation5 [shape = 'u8[8192]{0}', space=vmem, size = 0x2000, scoped, tag = 'input window, operand 1, single buffered']
    #allocation6 [shape = 's32[1]{0}', space=sflag, size = 0x4, scoped, tag = 'scoped memory for tpu_custom_call.1']
    #allocation7 [shape = 'u8[8192]{0}', space=vmem, size = 0x2000, scoped, tag = 'output window, operand 0, single buffered']
    %9 = vsyncpa [#allocation3], 0
    %10 = vsyncpa [#allocation6], 0
    %11 = vsyncpa [#allocation4], 0
    // Predicated region
    $region2: #{tpu_custom_call.1} parent=1 // pred_check
      _
    $region3: #{tpu_custom_call.1} parent=1 // pred_check_branch
      %13 = sbr.rel (0) target = $region5
    $region4: #{tpu_custom_call.1} parent=1 // pred_region
      %s15 = ssub.s32 256, 256
      %16 = vsyncadd [#allocation3], %s15
      %s17 = sshll.u32 [#allocation2], 4
      %s18 = int_to_ptr.vmem [resolvable:$true] %s17
      %23 = dma.hbm_to_vmem [thread:$0]  %s0, 256, %s18, [#allocation3], 128, 128, 8
    $region5: #{tpu_custom_call.1} parent=1 // pred_fallthru
      _
    // Predicated region
    $region6: #{tpu_custom_call.1} parent=1 // pred_check
      _
    $region7: #{tpu_custom_call.1} parent=1 // pred_check_branch
      %25 = sbr.rel (0) target = $region9
    $region8: #{tpu_custom_call.1} parent=1 // pred_region
      %s27 = ssub.s32 256, 256
      %28 = vsyncadd [#allocation6], %s27
      %s29 = sshll.u32 [#allocation5], 4
      %s30 = int_to_ptr.vmem [resolvable:$true] %s29
      %35 = dma.hbm_to_vmem [thread:$0]  %s1, 256, %s30, [#allocation6], 64, 64, 4
    $region9: #{tpu_custom_call.1} parent=1 // pred_fallthru
      _
    // Predicated region
    $region10: #{tpu_custom_call.1} parent=1 // pred_check
      _
    $region11: #{tpu_custom_call.1} parent=1 // pred_check_branch
      %37 = sbr.rel (0) target = $region13
    $region12: #{tpu_custom_call.1} parent=1 // pred_region
      _
    $region13: #{tpu_custom_call.1} parent=1 // pred_fallthru
      _
    // Predicated region
    $region14: #{tpu_custom_call.1} parent=1 // pred_check
      _
    $region15: #{tpu_custom_call.1} parent=1 // pred_check_branch
      %39 = sbr.rel (0) target = $region17
    $region16: #{tpu_custom_call.1} parent=1 // pred_region
      _
    $region17: #{tpu_custom_call.1} parent=1 // pred_fallthru
      _
    // Predicated region
    $region18: #{tpu_custom_call.1} parent=1 // pred_check
      _
    $region19: #{tpu_custom_call.1} parent=1 // pred_check_branch
      %41 = sbr.rel (0) target = $region21
    $region20: #{tpu_custom_call.1} parent=1 // pred_region
      %42 = dma.done [#allocation3], 256
    $region21: #{tpu_custom_call.1} parent=1 // pred_fallthru
      _
    // Predicated region
    $region22: #{tpu_custom_call.1} parent=1 // pred_check
      _
    $region23: #{tpu_custom_call.1} parent=1 // pred_check_branch
      %44 = sbr.rel (0) target = $region25
    $region24: #{tpu_custom_call.1} parent=1 // pred_region
      %45 = dma.done [#allocation6], 256
    $region25: #{tpu_custom_call.1} parent=1 // pred_fallthru
      _
    %v47 = vld [vmem:[#allocation2] sm:$0xff]
    %v48 = vld [vmem:[#allocation2 + $0x8] sm:$0xff]
    %v49 = vpack.c.bf16 %v48, %v47
    %v50 = vld [vmem:[#allocation5] sm:$0xf]
    %v51 = vld [vmem:[#allocation5 + $0x4] sm:$0xf]
    %v52 = vld [vmem:[#allocation5 + $0x8] sm:$0xf]
    %v53 = vld [vmem:[#allocation5 + $0xc] sm:$0xf]
    %v58 = vunpack.c.l.b16 %v50
    %v59 = vunpack.c.l.b16 %v51
    %v60 = vunpack.c.l.b16 %v52
    %v61 = vunpack.c.l.b16 %v53
    %v62 = vpack.c.b16 %v59, %v58
    %v63 = vpack.c.b16 %v61, %v60
    %vm66 = vcmask 261120
    %v68 = vsel %vm66, %v49, 0
    %70 = vmatprep.subr.bf16.mxu0 0
    %71 = vmatpush1.bf16.msra.mxu0 %v62
    %72 = vmatprep.subr.bf16.mxu0 0
    %73 = vmatpush1.bf16.msra.mxu0 %v63
    %74 = vmatprep.subr.bf16.mxu0 0
    %75 = vmatpush1.bf16.msra.mxu0 0
    %76 = vmatprep.subr.bf16.mxu0 0
    %77 = vmatpush1.bf16.msra.mxu0 0
    %78 = vmatprep.subr.bf16.mxu0 0
    %79 = vmatpush1.bf16.msra.mxu0 0
    %80 = vmatprep.subr.bf16.mxu0 0
    %81 = vmatpush1.bf16.msra.mxu0 0
    %82 = vmatprep.subr.bf16.mxu0 0
    %83 = vmatpush1.bf16.msra.mxu0 0
    %84 = vmatprep.subr.bf16.mxu0 0
    %85 = vmatpush1.bf16.msra.mxu0 0
    %86 = vmatprep.subr.bf16.mxu0 0
    %87 = vmatpush1.bf16.msra.mxu0 0
    %88 = vmatprep.subr.bf16.mxu0 0
    %89 = vmatpush1.bf16.msra.mxu0 0
    %90 = vmatprep.subr.bf16.mxu0 0
    %91 = vmatpush1.bf16.msra.mxu0 0
    %92 = vmatprep.subr.bf16.mxu0 0
    %93 = vmatpush1.bf16.msra.mxu0 0
    %94 = vmatprep.subr.bf16.mxu0 0
    %95 = vmatpush1.bf16.msra.mxu0 0
    %96 = vmatprep.subr.bf16.mxu0 0
    %97 = vmatpush1.bf16.msra.mxu0 0
    %98 = vmatprep.subr.bf16.mxu0 0
    %99 = vmatpush1.bf16.msra.mxu0 0
    %100 = vmatprep.subr.bf16.mxu0 0
    %101 = vmatpush1.bf16.msra.mxu0 0
    %102 = vmatprep.mubr.bf16.mxu0 0
    %103 = vmatmul.mubr.bf16.gmra.mrb[0].mxu0 %v68
    %v104 = vpop.f32.mrb[0].mxu0
    %v105 = vadd.f32 0.0, %v104
    %v106 = vpop.f32.mrb[0].mxu0
    %v107 = vpop.f32.mrb[0].mxu0
    %v108 = vadd.f32 0.0, %v107
    %v109 = vpop.f32.mrb[0].mxu0
    %110 = vdwg.mxu0
    %v111 = vmax.f32 %v105, 0.0
    %v112 = vmax.f32 %v108, 0.0
    %v113 = vpack.c.bf16 %v112, %v111
    %v114 = vld [vmem:[%s2] sm:$0xf]
    %v115 = vld [vmem:[%s2 + $0x4] sm:$0xf]
    %v116 = vld [vmem:[%s2 + $0x8] sm:$0xf]
    %v117 = vld [vmem:[%s2 + $0xc] sm:$0xf]
    %v118 = vld [vmem:[%s2 + $0x10] sm:$0xf]
    %v119 = vld [vmem:[%s2 + $0x14] sm:$0xf]
    %v120 = vld [vmem:[%s2 + $0x18] sm:$0xf]
    %v121 = vld [vmem:[%s2 + $0x1c] sm:$0xf]
    %v130 = vunpack.c.l.b16 %v114
    %v131 = vunpack.c.l.b16 %v115
    %v132 = vunpack.c.l.b16 %v116
    %v133 = vunpack.c.l.b16 %v117
    %v134 = vunpack.c.l.b16 %v118
    %v135 = vunpack.c.l.b16 %v119
    %v136 = vunpack.c.l.b16 %v120
    %v137 = vunpack.c.l.b16 %v121
    %v138 = vpack.c.b16 %v131, %v130
    %v139 = vpack.c.b16 %v133, %v132
    %v140 = vpack.c.b16 %v135, %v134
    %v141 = vpack.c.b16 %v137, %v136
    %vm146 = vcmask 523264
    %v148 = vsel %vm146, %v113, 0
    %150 = vmatprep.subr.bf16.mxu0 0
    %151 = vmatpush1.bf16.msra.mxu0 %v138
    %152 = vmatprep.subr.bf16.mxu0 0
    %153 = vmatpush1.bf16.msra.mxu0 %v139
    %154 = vmatprep.subr.bf16.mxu0 0
    %155 = vmatpush1.bf16.msra.mxu0 %v140
    %156 = vmatprep.subr.bf16.mxu0 0
    %157 = vmatpush1.bf16.msra.mxu0 %v141
    %158 = vmatprep.subr.bf16.mxu0 0
    %159 = vmatpush1.bf16.msra.mxu0 0
    %160 = vmatprep.subr.bf16.mxu0 0
    %161 = vmatpush1.bf16.msra.mxu0 0
    %162 = vmatprep.subr.bf16.mxu0 0
    %163 = vmatpush1.bf16.msra.mxu0 0
    %164 = vmatprep.subr.bf16.mxu0 0
    %165 = vmatpush1.bf16.msra.mxu0 0
    %166 = vmatprep.subr.bf16.mxu0 0
    %167 = vmatpush1.bf16.msra.mxu0 0
    %168 = vmatprep.subr.bf16.mxu0 0
    %169 = vmatpush1.bf16.msra.mxu0 0
    %170 = vmatprep.subr.bf16.mxu0 0
    %171 = vmatpush1.bf16.msra.mxu0 0
    %172 = vmatprep.subr.bf16.mxu0 0
    %173 = vmatpush1.bf16.msra.mxu0 0
    %174 = vmatprep.subr.bf16.mxu0 0
    %175 = vmatpush1.bf16.msra.mxu0 0
    %176 = vmatprep.subr.bf16.mxu0 0
    %177 = vmatpush1.bf16.msra.mxu0 0
    %178 = vmatprep.subr.bf16.mxu0 0
    %179 = vmatpush1.bf16.msra.mxu0 0
    %180 = vmatprep.subr.bf16.mxu0 0
    %181 = vmatpush1.bf16.msra.mxu0 0
    %182 = vmatprep.mubr.bf16.mxu0 0
    %183 = vmatmul.mubr.bf16.gmra.mrb[0].mxu0 %v148
    %v184 = vpop.f32.mrb[0].mxu0
    %v185 = vadd.f32 0.0, %v184
    %v186 = vpop.f32.mrb[0].mxu0
    %v187 = vpop.f32.mrb[0].mxu0
    %v188 = vadd.f32 0.0, %v187
    %v189 = vpop.f32.mrb[0].mxu0
    %190 = vdwg.mxu0
    %v191 = vmax.f32 %v185, 0.0
    %v192 = vmax.f32 %v188, 0.0
    %v193 = vpack.c.bf16 %v192, %v191
    %v194 = vld [vmem:[%s3] sm:$0xf]
    %v195 = vld [vmem:[%s3 + $0x4] sm:$0xf]
    %v196 = vld [vmem:[%s3 + $0x8] sm:$0xf]
    %v197 = vld [vmem:[%s3 + $0xc] sm:$0xf]
    %v198 = vld [vmem:[%s3 + $0x10] sm:$0xf]
    %v199 = vld [vmem:[%s3 + $0x14] sm:$0xf]
    %v200 = vld [vmem:[%s3 + $0x18] sm:$0xf]
    %v201 = vld [vmem:[%s3 + $0x1c] sm:$0xf]
    %v210 = vunpack.c.l.b16 %v194
    %v211 = vunpack.c.l.b16 %v195
    %v212 = vunpack.c.l.b16 %v196
    %v213 = vunpack.c.l.b16 %v197
    %v214 = vunpack.c.l.b16 %v198
    %v215 = vunpack.c.l.b16 %v199
    %v216 = vunpack.c.l.b16 %v200
    %v217 = vunpack.c.l.b16 %v201
    %v218 = vpack.c.b16 %v211, %v210
    %v219 = vpack.c.b16 %v213, %v212
    %v220 = vpack.c.b16 %v215, %v214
    %v221 = vpack.c.b16 %v217, %v216
    %v227 = vsel %vm146, %v193, 0
    %229 = vmatprep.subr.bf16.mxu0 0
    %230 = vmatpush1.bf16.msra.mxu0 %v218
    %231 = vmatprep.subr.bf16.mxu0 0
    %232 = vmatpush1.bf16.msra.mxu0 %v219
    %233 = vmatprep.subr.bf16.mxu0 0
    %234 = vmatpush1.bf16.msra.mxu0 %v220
    %235 = vmatprep.subr.bf16.mxu0 0
    %236 = vmatpush1.bf16.msra.mxu0 %v221
    %237 = vmatprep.subr.bf16.mxu0 0
    %238 = vmatpush1.bf16.msra.mxu0 0
    %239 = vmatprep.subr.bf16.mxu0 0
    %240 = vmatpush1.bf16.msra.mxu0 0
    %241 = vmatprep.subr.bf16.mxu0 0
    %242 = vmatpush1.bf16.msra.mxu0 0
    %243 = vmatprep.subr.bf16.mxu0 0
    %244 = vmatpush1.bf16.msra.mxu0 0
    %245 = vmatprep.subr.bf16.mxu0 0
    %246 = vmatpush1.bf16.msra.mxu0 0
    %247 = vmatprep.subr.bf16.mxu0 0
    %248 = vmatpush1.bf16.msra.mxu0 0
    %249 = vmatprep.subr.bf16.mxu0 0
    %250 = vmatpush1.bf16.msra.mxu0 0
    %251 = vmatprep.subr.bf16.mxu0 0
    %252 = vmatpush1.bf16.msra.mxu0 0
    %253 = vmatprep.subr.bf16.mxu0 0
    %254 = vmatpush1.bf16.msra.mxu0 0
    %255 = vmatprep.subr.bf16.mxu0 0
    %256 = vmatpush1.bf16.msra.mxu0 0
    %257 = vmatprep.subr.bf16.mxu0 0
    %258 = vmatpush1.bf16.msra.mxu0 0
    %259 = vmatprep.subr.bf16.mxu0 0
    %260 = vmatpush1.bf16.msra.mxu0 0
    %261 = vmatprep.mubr.bf16.mxu0 0
    %262 = vmatmul.mubr.bf16.gmra.mrb[0].mxu0 %v227
    %v263 = vpop.f32.mrb[0].mxu0
    %v264 = vadd.f32 0.0, %v263
    %v265 = vpop.f32.mrb[0].mxu0
    %v266 = vpop.f32.mrb[0].mxu0
    %v267 = vadd.f32 0.0, %v266
    %v268 = vpop.f32.mrb[0].mxu0
    %269 = vdwg.mxu0
    %vm270 = vcmask 130048
    %271 = vst.msk [vmem:[#allocation7] sm:$0xff] %vm270, %v264
    %272 = vst.msk [vmem:[#allocation7 + $0x8] sm:$0xff] %vm270, %v267
    // Predicated region
    $region26: #{tpu_custom_call.1} parent=1 // pred_check
      _
    $region27: #{tpu_custom_call.1} parent=1 // pred_check_branch
      %274 = sbr.rel (0) target = $region29
    $region28: #{tpu_custom_call.1} parent=1 // pred_region
      %s276 = ssub.s32 256, 256
      %277 = vsyncadd [#allocation4], %s276
      %s278 = sshll.u32 [#allocation7], 4
      %s279 = int_to_ptr.vmem [resolvable:$true] %s278
      %284 = dma.vmem_to_hbm [thread:$0]  %s279, 256, %s4, [#allocation4], 128, 128, 8
    $region29: #{tpu_custom_call.1} parent=1 // pred_fallthru
      _
    // Predicated region
    $region30: #{tpu_custom_call.1} parent=1 // pred_check
      _
    $region31: #{tpu_custom_call.1} parent=1 // pred_check_branch
      %286 = sbr.rel (0) target = $region33
    $region32: #{tpu_custom_call.1} parent=1 // pred_region
      %287 = dma.done [#allocation4], 256
    $region33: #{tpu_custom_call.1} parent=1 // pred_fallthru
      _
    %288 = vsyncpa [#allocation3], 1
    %289 = vsyncpa [#allocation6], 1
    %290 = vsyncpa [#allocation4], 1

</llo_original>
